<compile_context>
chip_gen: v5e
topology: v5e:2x2
jax: 0.10.0
libtpu: 0.0.40
codegen_flags: <defaults>
</compile_context>

<pallas_src>
import functools
import math

import jax
import jax.numpy as jnp
from jax import lax
from jax.experimental import pallas as pl
from jax.experimental.pallas import tpu as pltpu


# Contract the minor dims of both operands: A (K, tk) x B (tm, tk) -> (K, tm) = A @ B^T.
# This is the MXU-native "transposed RHS" form (same dims as q @ k^T in flash attention).
_NT_DIMS = (((1,), (1,)), ((), ()))


def _fiedler_kernel(scale_ref, L_ref, yT_ref, outT_ref, acc_ref, *, tm, tk):
    i = pl.program_id(0)
    k = pl.program_id(1)
    ni = pl.num_programs(0)
    nk = pl.num_programs(1)

    # Zero the resident ((L + L^T) y)^T accumulator on the very first grid step.
    @pl.when((i == 0) & (k == 0))
    def _init():
        acc_ref[...] = jnp.zeros_like(acc_ref)

    tile = L_ref[...]                              # (tm, tk) = L[i_blk, k_blk]
    col_i = pl.multiple_of(i * tm, tm)             # lane offsets (tm, tk are 128-multiples)
    col_k = pl.multiple_of(k * tk, tk)
    yT_i = yT_ref[:, pl.ds(col_i, tm)]             # (K, tm)
    yT_k = yT_ref[:, pl.ds(col_k, tk)]             # (K, tk)
    if tile.dtype != yT_i.dtype:                   # bf16-streamed L: run the MXU in bf16,
        yT_i = yT_i.astype(tile.dtype)             # accumulate in f32 below.
        yT_k = yT_k.astype(tile.dtype)

    # y^T L contribution to columns [k*tk, k*tk+tk): canonical MXU dot.
    acc_ref[:, pl.ds(col_k, tk)] += jnp.dot(
        yT_i, tile, preferred_element_type=jnp.float32)
    # y^T L^T contribution to columns [i*tm, i*tm+tm): A @ B^T form, reusing the same
    # streamed tile (L is read from HBM exactly once, no transposed copy materialized).
    acc_ref[:, pl.ds(col_i, tm)] += lax.dot_general(
        yT_k, tile, dimension_numbers=_NT_DIMS,
        preferred_element_type=jnp.float32)

    # Finalize once, after every tile of L has been consumed: lane-wise epilogue.
    @pl.when((i == ni - 1) & (k == nk - 1))
    def _finalize():
        scale = scale_ref[0]                       # relu(alpha)/N, folded in the wrapper
        y_newT = yT_ref[...] - scale * acc_ref[...]
        sumsq = jnp.sum(y_newT * y_newT, axis=-1, keepdims=True)   # (K, 1) lane reduce
        # rsqrt(max(sumsq, 1e-24)) == 1 / max(norm, 1e-12)  (F.normalize eps semantics)
        inv_norm = lax.rsqrt(jnp.maximum(sumsq, 1e-24))            # EUP
        outT_ref[...] = (y_newT * inv_norm).astype(outT_ref.dtype)


def _round_up(x: int, m: int) -> int:
    return ((x + m - 1) // m) * m


def fiedler_step(L: jax.Array,
                 y: jax.Array,
                 alpha=1.0,
                 trainable_alpha: bool = False,
                 tile_m: int | None = None,
                 tile_k: int | None = None,
                 l_dtype=None,
                 l_buffer_count: int | None = None) -> jax.Array:
    """One Fiedler-vector update step. L: (N, N), y: (N,) or (N, K)."""
    assert L.ndim == 2 and L.shape[0] == L.shape[1], "L must be square (N, N)"
    squeeze = (y.ndim == 1)
    y2 = y[:, None] if squeeze else y
    assert y2.ndim == 2 and y2.shape[0] == L.shape[0], "y must be (N,) or (N, K)"
    N, K = y2.shape

    # ---- tiles & padding (no full-extent fallback; pad N to a 128-multiple instead).
    if tile_m is not None or tile_k is not None:
        tm = int(tile_m) if tile_m is not None else 256
        tk = int(tile_k) if tile_k is not None else 256
        if tm % 128 or tk % 128:
            raise ValueError("tile_m and tile_k must be multiples of 128")
        Np = _round_up(N, math.lcm(tm, tk, 128))
    else:
        Np = _round_up(N, 128)
        # ~2 MiB f32 L tiles: big enough to sit near the HBM roofline, small enough
        # for double/triple buffering on v7x's 64 MiB VMEM.
        tm = next(c for c in (512, 256, 128) if Np % c == 0)
        tk = next(c for c in (1024, 512, 256, 128) if Np % c == 0)
    ni, nk = Np // tm, Np // tk
    Kp = _round_up(max(K, 1), 8)                   # pad to full sublanes

    # ---- operands (wrapper-side layout plumbing only; all O(N*K) or a single pad of L).
    l_dt = jnp.dtype(l_dtype) if l_dtype is not None else jnp.dtype(jnp.float32)
    L_s = L.astype(l_dt)
    if Np != N:
        L_s = jnp.pad(L_s, ((0, Np - N), (0, Np - N)))
    yT = jnp.asarray(y2, jnp.float32).T            # (K, N), lane-dense
    if Kp != K or Np != N:
        yT = jnp.pad(yT, ((0, Kp - K), (0, Np - N)))

    # Fold relu(alpha)/N into one SMEM scalar (N is the ORIGINAL row count, per torch).
    alpha_eff = jnp.asarray(alpha, dtype=jnp.float32)
    if trainable_alpha:
        alpha_eff = jnp.maximum(alpha_eff, 0.0)
    scale = jnp.reshape(alpha_eff / jnp.float32(N), (1,))

    kernel = functools.partial(_fiedler_kernel, tm=tm, tk=tk)

    # L streamed once + yT in + outT out; the accumulator is VMEM scratch (not HBM).
    cost = pl.CostEstimate(
        flops=4 * Np * Np * Kp,
        transcendentals=Kp,
        bytes_accessed=Np * Np * l_dt.itemsize + 2 * Kp * Np * 4,
    )

    # VMEM budget (L buffers + resident yT/outT + accumulator), with headroom.
    n_l_bufs = l_buffer_count if l_buffer_count is not None else 2
    vmem_est = (n_l_bufs * tm * tk * l_dt.itemsize
                + 2 * Kp * Np * 4          # resident yT (worst-case double buffered)
                + 2 * Kp * Np * 4          # resident outT
                + Kp * Np * 4)             # accumulator scratch
    vmem_limit = int(min(100 * 2**20, max(32 * 2**20, int(1.5 * vmem_est))))

    l_spec_kwargs = {}
    if l_buffer_count is not None and l_buffer_count != 2:
        # e.g. l_buffer_count=3 on v7x to keep the DMA fully hidden at step boundaries.
        l_spec_kwargs["pipeline_mode"] = pl.Buffered(l_buffer_count)
    l_spec = pl.BlockSpec((tm, tk), lambda i, k: (i, k), **l_spec_kwargs)

    outT = pl.pallas_call(
        kernel,
        out_shape=jax.ShapeDtypeStruct((Kp, Np), jnp.float32),
        grid_spec=pltpu.PrefetchScalarGridSpec(
            num_scalar_prefetch=0,
            grid=(ni, nk),
            in_specs=[
                pl.BlockSpec(memory_space=pltpu.SMEM),             # relu(alpha)/N scalar
                l_spec,                                            # L tile, streamed once
                pl.BlockSpec((Kp, Np), lambda i, k: (0, 0)),       # y^T resident in VMEM
            ],
            out_specs=pl.BlockSpec((Kp, Np), lambda i, k: (0, 0)), # resident (K, N) output
            scratch_shapes=[pltpu.VMEM((Kp, Np), jnp.float32)],    # ((L + L^T) y)^T acc
        ),
        compiler_params=pltpu.CompilerParams(
            # The shared accumulator is written at both i- and k-indexed columns every
            # step, so BOTH axes must stay sequential (never flip these to "parallel").
            dimension_semantics=("arbitrary", "arbitrary"),
            vmem_limit_bytes=vmem_limit,
        ),
        cost_estimate=cost,
    )(scale, L_s, yT)

    out = outT[:K, :N].T.astype(y.dtype)           # un-pad + back to (N, K) in XLA (tiny)
    return out[:, 0] if squeeze else out


def _reference(L, y, alpha=1.0, trainable_alpha=False):
    a = jnp.asarray(alpha, jnp.float32)
    if trainable_alpha:
        a = jnp.maximum(a, 0.0)
    Ly = jnp.matmul(L + L.T, y, precision=lax.Precision.HIGHEST)
    y_new = y - a * Ly / y.shape[0]
    norm = jnp.sqrt(jnp.sum(y_new * y_new, axis=0, keepdims=True))
    return y_new / jnp.maximum(norm, 1e-12)


if __name__ == "__main__":
    key = jax.random.PRNGKey(0)
    kL, ky, kL2, ky2 = jax.random.split(key, 4)

    # Case 1: tiled streaming path with a (2, 2) grid (includes diagonal-overlap blocks).
    N, K = 256, 1
    L = jax.random.normal(kL, (N, N), dtype=jnp.float32)
    y = jax.random.normal(ky, (N, K), dtype=jnp.float32)
    out = jax.block_until_ready(fiedler_step(L, y, alpha=1.0, tile_m=128, tile_k=128))
    ref = _reference(L, y, alpha=1.0)
    assert out.shape == (N, K)
    assert jnp.allclose(out, ref, atol=1e-4, rtol=1e-3), "mismatch vs reference"

    # Case 2: trainable-alpha (ReLU) path with a negative alpha -> pure normalize(y).
    out2 = jax.block_until_ready(
        fiedler_step(L, y, alpha=-0.5, trainable_alpha=True, tile_m=128, tile_k=128))
    ref2 = _reference(L, y, alpha=-0.5, trainable_alpha=True)
    assert jnp.allclose(out2, ref2, atol=1e-4, rtol=1e-3), "mismatch (trainable alpha)"

    # Case 3: N not divisible by the tile granularity -> zero-padding path, default tiles,
    # 1-D y also supported.
    N3 = 200
    L3 = jax.random.normal(kL2, (N3, N3), dtype=jnp.float32)
    y3 = jax.random.normal(ky2, (N3,), dtype=jnp.float32)
    out3 = jax.block_until_ready(fiedler_step(L3, y3, alpha=0.7))
    ref3 = _reference(L3, y3.reshape(-1, 1), alpha=0.7).reshape(-1)
    assert out3.shape == (N3,)
    assert jnp.allclose(out3, ref3, atol=1e-4, rtol=1e-3), "mismatch (padded N / 1-D y)"

    # Case 4: bf16-streamed L (halves HBM traffic), f32 accumulation.
    out4 = jax.block_until_ready(
        fiedler_step(L, y, alpha=1.0, l_dtype=jnp.bfloat16, tile_m=128, tile_k=128))
    assert jnp.allclose(out4, ref, atol=2e-3, rtol=2e-2), "mismatch (bf16 L streaming)"

    print("KERNEL_OK")
</pallas_src>

<mosaic_0001>
module attributes {stable_mosaic.version = 11 : i64} {
  func.func @_fiedler_kernel(%arg0: i32, %arg1: i32, %arg2: memref<1xf32, #tpu.memory_space<smem>>, %arg3: memref<128x128xf32, #tpu.memory_space<vmem>>, %arg4: memref<8x256xf32, #tpu.memory_space<vmem>>, %arg5: memref<8x256xf32, #tpu.memory_space<vmem>>, %arg6: memref<8x256xf32, #tpu.memory_space<vmem>>) attributes {dimension_semantics = [#tpu.dimension_semantics<arbitrary>, #tpu.dimension_semantics<arbitrary>], iteration_bounds = array<i64: 2, 2>, scalar_prefetch = 0 : i64, scratch_operands = 1 : i64, tpu.core_type = #tpu.core_type<tc>, window_params = [{transform_indices = @transform_0, window_bounds = array<i64: 1>}, {transform_indices = @transform_1, window_bounds = array<i64: 128, 128>}, {pipeline_mode = #tpu.pipeline_mode<synchronous>, transform_indices = @transform_2, window_bounds = array<i64: 8, 256>}, {pipeline_mode = #tpu.pipeline_mode<synchronous>, transform_indices = @transform_3, window_bounds = array<i64: 8, 256>}]} {
    %c0_i32 = arith.constant 0 : i32
    %0 = arith.cmpi eq, %arg0, %c0_i32 : i32
    %c0_i32_0 = arith.constant 0 : i32
    %1 = arith.cmpi eq, %arg1, %c0_i32_0 : i32
    %2 = arith.andi %0, %1 : i1
    %3 = arith.extui %2 : i1 to i32
    %c0_i32_1 = arith.constant 0 : i32
    %4 = arith.cmpi ne, %3, %c0_i32_1 : i32
    scf.if %4 {
      %cst_13 = arith.constant 0.000000e+00 : f32
      %31 = vector.broadcast %cst_13 : f32 to vector<8x256xf32>
      %c0_14 = arith.constant 0 : index
      %c0_15 = arith.constant 0 : index
      %32 = vector.load %arg6[%c0_14, %c0_15] : memref<8x256xf32, #tpu.memory_space<vmem>>, vector<8x256xf32>
      tpu.vector_store %arg6[%c0_14, %c0_15], %31 {strides = array<i32>} : memref<8x256xf32, #tpu.memory_space<vmem>>, vector<8x256xf32>,
    } else {
    }
    %c0 = arith.constant 0 : index
    %c0_2 = arith.constant 0 : index
    %5 = vector.load %arg3[%c0, %c0_2] : memref<128x128xf32, #tpu.memory_space<vmem>>, vector<128x128xf32>
    %c128_i32 = arith.constant 128 : i32
    %6 = arith.muli %arg0, %c128_i32 : i32
    %7 = tpu.assume_multiple %6, 128 : i32
    %c128_i32_3 = arith.constant 128 : i32
    %8 = arith.muli %arg1, %c128_i32_3 : i32
    %9 = tpu.assume_multiple %8, 128 : i32
    %c0_4 = arith.constant 0 : index
    %10 = arith.index_cast %7 : i32 to index
    %11 = vector.load %arg4[%c0_4, %10] : memref<8x256xf32, #tpu.memory_space<vmem>>, vector<8x128xf32>
    %c0_5 = arith.constant 0 : index
    %12 = arith.index_cast %9 : i32 to index
    %13 = vector.load %arg4[%c0_5, %12] : memref<8x256xf32, #tpu.memory_space<vmem>>, vector<8x128xf32>
    %c0_6 = arith.constant 0 : index
    %14 = arith.index_cast %9 : i32 to index
    %15 = vector.load %arg6[%c0_6, %14] : memref<8x256xf32, #tpu.memory_space<vmem>>, vector<8x128xf32>
    %cst = arith.constant dense<0.000000e+00> : vector<8x128xf32>
    %16 = tpu.matmul %11, %5, %cst {dimension_numbers = #tpu.dot_dimension_numbers<[1], [0], [0], [1], [0, 0, 1, 1], [], []>} : vector<8x128xf32>, vector<128x128xf32>, vector<8x128xf32> -> vector<8x128xf32>
    %17 = arith.addf %15, %16 : vector<8x128xf32>
    %c0_7 = arith.constant 0 : index
    %18 = arith.index_cast %9 : i32 to index
    %19 = vector.load %arg6[%c0_7, %18] : memref<8x256xf32, #tpu.memory_space<vmem>>, vector<8x128xf32>
    tpu.vector_store %arg6[%c0_7, %18], %17 {strides = array<i32>} : memref<8x256xf32, #tpu.memory_space<vmem>>, vector<8x128xf32>,
    %c0_8 = arith.constant 0 : index
    %20 = arith.index_cast %7 : i32 to index
    %21 = vector.load %arg6[%c0_8, %20] : memref<8x256xf32, #tpu.memory_space<vmem>>, vector<8x128xf32>
    %cst_9 = arith.constant dense<0.000000e+00> : vector<8x128xf32>
    %22 = tpu.matmul %13, %5, %cst_9 {dimension_numbers = #tpu.dot_dimension_numbers<[1], [1], [0], [0], [0, 0, 1, 0], [], []>} : vector<8x128xf32>, vector<128x128xf32>, vector<8x128xf32> -> vector<8x128xf32>
    %23 = arith.addf %21, %22 : vector<8x128xf32>
    %c0_10 = arith.constant 0 : index
    %24 = arith.index_cast %7 : i32 to index
    %25 = vector.load %arg6[%c0_10, %24] : memref<8x256xf32, #tpu.memory_space<vmem>>, vector<8x128xf32>
    tpu.vector_store %arg6[%c0_10, %24], %23 {strides = array<i32>} : memref<8x256xf32, #tpu.memory_space<vmem>>, vector<8x128xf32>,
    %c1_i32 = arith.constant 1 : i32
    %26 = arith.cmpi eq, %arg0, %c1_i32 : i32
    %c1_i32_11 = arith.constant 1 : i32
    %27 = arith.cmpi eq, %arg1, %c1_i32_11 : i32
    %28 = arith.andi %26, %27 : i1
    %29 = arith.extui %28 : i1 to i32
    %c0_i32_12 = arith.constant 0 : i32
    %30 = arith.cmpi ne, %29, %c0_i32_12 : i32
    scf.if %30 {
      %c0_13 = arith.constant 0 : index
      %31 = memref.load %arg2[%c0_13] : memref<1xf32, #tpu.memory_space<smem>>
      %c0_14 = arith.constant 0 : index
      %c0_15 = arith.constant 0 : index
      %32 = vector.load %arg4[%c0_14, %c0_15] : memref<8x256xf32, #tpu.memory_space<vmem>>, vector<8x256xf32>
      %c0_16 = arith.constant 0 : index
      %c0_17 = arith.constant 0 : index
      %33 = vector.load %arg6[%c0_16, %c0_17] : memref<8x256xf32, #tpu.memory_space<vmem>>, vector<8x256xf32>
      %34 = vector.broadcast %31 : f32 to vector<8x256xf32>
      %35 = arith.mulf %34, %33 : vector<8x256xf32>
      %36 = arith.subf %32, %35 : vector<8x256xf32>
      %37 = arith.mulf %36, %36 : vector<8x256xf32>
      %cst_18 = arith.constant dense<0.000000e+00> : vector<8xf32>
      %38 = vector.multi_reduction <add>, %37, %cst_18 [1] : vector<8x256xf32> to vector<8xf32>
      %39 = vector.shape_cast %38 : vector<8xf32> to vector<8x1xf32>
      %cst_19 = arith.constant 1.000000e-24 : f32
      %40 = vector.broadcast %cst_19 : f32 to vector<8x1xf32>
      %41 = arith.maximumf %39, %40 : vector<8x1xf32>
      %42 = math.rsqrt %41 : vector<8x1xf32>
      %43 = vector.broadcast %42 : vector<8x1xf32> to vector<8x256xf32>
      %44 = arith.mulf %36, %43 : vector<8x256xf32>
      %c0_20 = arith.constant 0 : index
      %c0_21 = arith.constant 0 : index
      %45 = vector.load %arg5[%c0_20, %c0_21] : memref<8x256xf32, #tpu.memory_space<vmem>>, vector<8x256xf32>
      tpu.vector_store %arg5[%c0_20, %c0_21], %44 {strides = array<i32>} : memref<8x256xf32, #tpu.memory_space<vmem>>, vector<8x256xf32>,
    } else {
    }
    return
  }
  func.func @transform_0(%arg0: i32, %arg1: i32) -> i32 {
    %c0_i32 = arith.constant 0 : i32
    %c0_i32_0 = arith.constant 0 : i32
    return %c0_i32 : i32
  }
  func.func @transform_1(%arg0: i32, %arg1: i32) -> (i32, i32) {
    %c0_i32 = arith.constant 0 : i32
    return %arg0, %arg1 : i32, i32
  }
  func.func @transform_2(%arg0: i32, %arg1: i32) -> (i32, i32) {
    %c0_i32 = arith.constant 0 : i32
    %c0_i32_0 = arith.constant 0 : i32
    %c0_i32_1 = arith.constant 0 : i32
    return %c0_i32, %c0_i32_0 : i32, i32
  }
  func.func @transform_3(%arg0: i32, %arg1: i32) -> (i32, i32) {
    %c0_i32 = arith.constant 0 : i32
    %c0_i32_0 = arith.constant 0 : i32
    %c0_i32_1 = arith.constant 0 : i32
    return %c0_i32, %c0_i32_0 : i32, i32
  }
}

</mosaic_0001>

<llo_original>
// kernel: tpu_custom_call.1
$region0: #{tpu_custom_call.1}
  #allocation0 [shape = 'u32[]', space=smem, size = 0x4, offset = 0x4, fixed_abs, tag = 'smem constant byte address 0x4 - core index']
  #allocation1 [shape = 'u32[72,128]{1,0:T(1,128)}', space=vmem, size = 0x9000, scoped, tag = 'internal scratch']
  #allocation2 [shape = 'f32[8,256]{1,0:T(8,128)}', space=vmem, size = 0x2000, scoped, tag = 'scratch operand']
  #allocation3 [shape = 'f32[1]{0:T(128)S(6)}', space=smem, size = 0x200, scoped, tag = 'scoped memory for tpu_custom_call.1']
  %s0 = inlined_call_operand.<no memory space> [shape: f32[1], index: 0, kind: input, shape index: {}]
  %s1 = inlined_call_operand.hbm [shape: f32[256,256], index: 1, kind: input, shape index: {}]
  %s2 = inlined_call_operand.hbm [shape: f32[8,256], index: 2, kind: input, shape index: {}]
  %s3 = inlined_call_operand.hbm [shape: f32[8,256], index: 3, kind: output, shape index: {}]
  %s4 = sld [smem:[#allocation0]]
  $region61: #{tpu_custom_call.1} parent=0
    _
  %s6 = ssub.s32 1, %s4
  %s7 = scalar_select 0, %s6, %s4
  %8 = sst [smem:[#allocation3]] %s0
  $region1: #{tpu_custom_call.1} parent=0
    #allocation4 [shape = 'u8[131072]{0}', space=vmem, size = 0x20000, scoped, tag = 'input window, operand 1']
    #allocation5 [shape = 's32[2]{0}', space=sflag, size = 0x8, scoped, tag = 'scoped memory for tpu_custom_call.1']
    #allocation6 [shape = 's32[2]{0}', space=sflag, size = 0x8, scoped, tag = 'scoped memory for tpu_custom_call.1']
    #allocation7 [shape = 'u8[8192]{0}', space=vmem, size = 0x2000, scoped, tag = 'input window, operand 2, single buffered']
    #allocation8 [shape = 's32[1]{0}', space=sflag, size = 0x4, scoped, tag = 'scoped memory for tpu_custom_call.1']
    #allocation9 [shape = 'u8[8192]{0}', space=vmem, size = 0x2000, scoped, tag = 'output window, operand 0, single buffered']
    %9 = vsyncpa [#allocation5], 0
    %s10 = scalar_lea.sflag [#allocation5], 1
    %11 = vsyncpa %s10, 0
    %12 = vsyncpa [#allocation8], 0
    %13 = vsyncpa [#allocation6], 0
    loop: start=0, step=1, limit=6
    $region2: #{tpu_custom_call.1} parent=1 // loop_pre_header
      _
    $region3: #{tpu_custom_call.1} parent=1 // loop_header
      %s15 = sphi 0, %s19
      %p16 = scmp.ge.s32.totalorder %s15, 6
      %s22 = sphi 0, %s34
      %s23 = sphi 0, %s30
      %s24 = sphi 0, %s22
      %s25 = sphi 0, %s23
      %s26 = sphi 0, %s24
      %s27 = sphi 0, %s25
      %s35 = sphi 0, %s35
      %s37 = sphi 0, %s35
      %s38 = sphi 0, %s37
      %s52 = sphi 0, %s38
      %s60 = sphi 0, %s62
      %s63 = sphi 0, %s60
      %s64 = sphi 0, %s63
      %s80 = sphi 0, %s64
      %s84 = sphi 0, %s84
      %s86 = sphi 0, %s84
      %s87 = sphi 0, %s86
      %s101 = sphi 0, %s87
      %s105 = sphi 0, %s105
      %s107 = sphi 0, %s105
      %s108 = sphi 0, %s107
      %s122 = sphi 0, %s108
    $region4: #{tpu_custom_call.1} parent=1 // loop_header_branch
      %18 = sbr.rel (%p16) target = $region8
    $region5: #{tpu_custom_call.1} parent=1 // loop_body
      %s20 = ssub.s32 %s15, 1
      %s21 = ssub.s32 %s15, 2
      %s28 = sadd.s32 1, %s23
      %p29 = scmp.ge.s32.totalorder %s28, 2
      %s30 = scalar_select %p29, 0, %s28
      %s31 = sadd.s32 1, %s22
      %s32 = scalar_select %p29, %s31, %s22
      %p33 = scmp.ge.s32.totalorder %s32, 2
      %s34 = scalar_select %p33, 0, %s32
      %s36 = sadd.s32 %s35, 1
      %p39 = scmp.eq.s32.totalorder %s15, 3
      %p40 = scmp.ne.s32.totalorder %s35, %s37
      %p41 = scmp.eq.s32.totalorder %s15, 0
      %p42 = por %p40, %p41
      %p43 = scmp.ne.s32.totalorder %s35, %s37
      %p44 = scmp.eq.s32.totalorder %s20, 3
      %p45 = por %p43, %p44
      %p46 = scmp.ne.s32.totalorder %s37, %s38
      %p47 = scmp.eq.s32.totalorder %s20, 0
      %p48 = por %p46, %p47
      %p49 = scmp.ne.s32.totalorder %s37, %s38
      %p50 = scmp.eq.s32.totalorder %s21, 3
      %p51 = por %p49, %p50
      %p53 = scmp.ne.s32.totalorder %s38, %s52
      %p54 = scmp.eq.s32.totalorder %s21, 0
      %p55 = por %p53, %p54
      %s56 = ssub.s32 %s22, %s34
      %s57 = ssub.s32 %s23, %s30
      %s58 = sor.u32 %s56, %s57
      %p59 = scmp.eq.s32.totalorder %s58, 0
      %s61 = sadd.s32 %s60, 1
      %s62 = scalar_select %p59, %s60, %s61
      %p65 = pneg %p59
      %p66 = scmp.eq.s32.totalorder %s15, 3
      %p67 = por %p65, %p66
      %p68 = scmp.ne.s32.totalorder %s60, %s63
      %p69 = scmp.eq.s32.totalorder %s15, 0
      %p70 = por %p68, %p69
      %p71 = scmp.ne.s32.totalorder %s60, %s63
      %p72 = scmp.eq.s32.totalorder %s20, 3
      %p73 = por %p71, %p72
      %p74 = scmp.ne.s32.totalorder %s63, %s64
      %p75 = scmp.eq.s32.totalorder %s20, 0
      %p76 = por %p74, %p75
      %p77 = scmp.ne.s32.totalorder %s63, %s64
      %p78 = scmp.eq.s32.totalorder %s21, 3
      %p79 = por %p77, %p78
      %p81 = scmp.ne.s32.totalorder %s64, %s80
      %p82 = scmp.eq.s32.totalorder %s21, 0
      %p83 = por %p81, %p82
      %s85 = sadd.s32 %s84, 1
      %p88 = scmp.eq.s32.totalorder %s15, 3
      %p89 = scmp.ne.s32.totalorder %s84, %s86
      %p90 = scmp.eq.s32.totalorder %s15, 0
      %p91 = por %p89, %p90
      %p92 = scmp.ne.s32.totalorder %s84, %s86
      %p93 = scmp.eq.s32.totalorder %s20, 3
      %p94 = por %p92, %p93
      %p95 = scmp.ne.s32.totalorder %s86, %s87
      %p96 = scmp.eq.s32.totalorder %s20, 0
      %p97 = por %p95, %p96
      %p98 = scmp.ne.s32.totalorder %s86, %s87
      %p99 = scmp.eq.s32.totalorder %s21, 3
      %p100 = por %p98, %p99
      %p102 = scmp.ne.s32.totalorder %s87, %s101
      %p103 = scmp.eq.s32.totalorder %s21, 0
      %p104 = por %p102, %p103
      %s106 = sadd.s32 %s105, 1
      %p109 = scmp.eq.s32.totalorder %s15, 3
      %p110 = scmp.ne.s32.totalorder %s105, %s107
      %p111 = scmp.eq.s32.totalorder %s15, 0
      %p112 = por %p110, %p111
      %p113 = scmp.ne.s32.totalorder %s105, %s107
      %p114 = scmp.eq.s32.totalorder %s20, 3
      %p115 = por %p113, %p114
      %p116 = scmp.ne.s32.totalorder %s107, %s108
      %p117 = scmp.eq.s32.totalorder %s20, 0
      %p118 = por %p116, %p117
      %p119 = scmp.ne.s32.totalorder %s107, %s108
      %p120 = scmp.eq.s32.totalorder %s21, 3
      %p121 = por %p119, %p120
      %p123 = scmp.ne.s32.totalorder %s108, %s122
      %p124 = scmp.eq.s32.totalorder %s21, 0
      %p125 = por %p123, %p124
      %p126 = scmp.le.s32.totalorder 1, %s15
      %p127 = scmp.lt.s32.totalorder %s15, 5
      %p128 = pnand %p126, %p127
      %p129 = pneg %p128
      // Predicated region
      $region9: #{tpu_custom_call.1} parent=5 // pred_check
        _
      $region10: #{tpu_custom_call.1} parent=5 // pred_check_branch
        %131 = sbr.rel (%p128) target = $region12
      $region11: #{tpu_custom_call.1} parent=5 // pred_region
        %s132 = ssub.s32 %s15, 1
        // Predicated region
        $region13: #{tpu_custom_call.1} parent=11 // pred_check
          %p133 = pneg %p48
        $region14: #{tpu_custom_call.1} parent=11 // pred_check_branch
          %135 = sbr.rel (%p133) target = $region16
        $region15: #{tpu_custom_call.1} parent=11 // pred_region
          _
        $region16: #{tpu_custom_call.1} parent=11 // pred_fallthru
          _
        // Predicated region
        $region17: #{tpu_custom_call.1} parent=11 // pred_check
          %p136 = pneg %p97
        $region18: #{tpu_custom_call.1} parent=11 // pred_check_branch
          %138 = sbr.rel (%p136) target = $region20
        $region19: #{tpu_custom_call.1} parent=11 // pred_region
          %140 = vsyncadd [#allocation8], 0
          %s142 = sshll.u32 %s2, 4
          %s143 = int_to_ptr.hbm [resolvable:$true] %s142
          %s144 = sshll.u32 [#allocation7], 4
          %s145 = int_to_ptr.vmem [resolvable:$true] %s144
          %147 = dma.hbm_to_vmem [thread:$0]  %s143, 256, %s145, [#allocation8]
        $region20: #{tpu_custom_call.1} parent=11 // pred_fallthru
          _
      $region12: #{tpu_custom_call.1} parent=5 // pred_fallthru
        _
      %p148 = scmp.lt.s32.totalorder %s15, 4
      // Predicated region
      $region21: #{tpu_custom_call.1} parent=5 // pred_check
        %p149 = pneg %p148
      $region22: #{tpu_custom_call.1} parent=5 // pred_check_branch
        %151 = sbr.rel (%p149) target = $region24
      $region23: #{tpu_custom_call.1} parent=5 // pred_region
        // Predicated region
        $region25: #{tpu_custom_call.1} parent=23 // pred_check
          %p152 = pneg %p70
        $region26: #{tpu_custom_call.1} parent=23 // pred_check_branch
          %154 = sbr.rel (%p152) target = $region28
        $region27: #{tpu_custom_call.1} parent=23 // pred_region
          %s155 = sand.u32 %s60, 1
          %s156 = scalar_lea.sflag [#allocation5], %s155
          %s157 = sand.u32 %s60, 1
          %s158 = smul.addr %s157, 128
          %s159 = scalar_lea.vmem [#allocation4], %s158
          %s160 = smul.u32 16, %s22
          %162 = vsyncadd %s156, 0
          %s163 = smul.addr %s160, 2
          %s164 = sadd.s32 %s23, %s163
          %s165 = smul.addr %s164, 8
          %s166 = scalar_lea.hbm %s1, %s165
          %s167 = sshll.u32 %s166, 4
          %s168 = int_to_ptr.hbm [resolvable:$true] %s167
          %s169 = sshll.u32 %s159, 4
          %s170 = int_to_ptr.vmem [resolvable:$true] %s169
          %175 = dma.hbm_to_vmem [thread:$0]  %s168, 2048, %s170, %s156, 256, 128, 8
        $region28: #{tpu_custom_call.1} parent=23 // pred_fallthru
          _
      $region24: #{tpu_custom_call.1} parent=5 // pred_fallthru
        _
      %p176 = scmp.le.s32.totalorder 1, %s15
      %p177 = scmp.lt.s32.totalorder %s15, 5
      %p178 = pnand %p176, %p177
      %p179 = pneg %p178
      // Predicated region
      $region29: #{tpu_custom_call.1} parent=5 // pred_check
        _
      $region30: #{tpu_custom_call.1} parent=5 // pred_check_branch
        %181 = sbr.rel (%p178) target = $region32
      $region31: #{tpu_custom_call.1} parent=5 // pred_region
        %s182 = ssub.s32 %s15, 1
        %s183 = sand.u32 %s63, 1
        %s184 = scalar_lea.sflag [#allocation5], %s183
        %s185 = sand.u32 %s63, 1
        %s186 = smul.addr %s185, 128
        %s187 = scalar_lea.vmem [#allocation4], %s186
        // Predicated region
        $region33: #{tpu_custom_call.1} parent=31 // pred_check
          %p188 = pneg %p76
        $region34: #{tpu_custom_call.1} parent=31 // pred_check_branch
          %190 = sbr.rel (%p188) target = $region36
        $region35: #{tpu_custom_call.1} parent=31 // pred_region
          %192 = dma.done %s184, 2048
        $region36: #{tpu_custom_call.1} parent=31 // pred_fallthru
          _
        // Predicated region
        $region37: #{tpu_custom_call.1} parent=31 // pred_check
          %p193 = pneg %p97
        $region38: #{tpu_custom_call.1} parent=31 // pred_check_branch
          %195 = sbr.rel (%p193) target = $region40
        $region39: #{tpu_custom_call.1} parent=31 // pred_region
          %197 = dma.done [#allocation8], 256
        $region40: #{tpu_custom_call.1} parent=31 // pred_fallthru
          _
        %p198 = pneg %p48
        %p199 = pneg %p45
        %s200 = sand.u32 %s63, 1
        %s201 = scalar_lea.sflag [#allocation5], %s200
        %s202 = sand.u32 %s63, 1
        %s203 = smul.addr %s202, 128
        %s204 = scalar_lea.vmem [#allocation4], %s203
        %p205 = pneg %p76
        %p206 = pneg %p73
        %p207 = pneg %p97
        %p208 = pneg %p94
        %p209 = pneg %p118
        %p210 = pneg %p115
        %s211 = smul.u32 16, %s24
        %p212 = scmp.eq.s32.totalorder %s24, 0
        %p213 = scmp.eq.s32.totalorder %s25, 0
        %p214 = pnand %p212, %p213
        %p215 = pneg %p214
        // Predicated region
        $region41: #{tpu_custom_call.1} parent=31 // pred_check
          _
        $region42: #{tpu_custom_call.1} parent=31 // pred_check_branch
          %217 = sbr.rel (%p214) target = $region44
        $region43: #{tpu_custom_call.1} parent=31 // pred_region
          %218 = vst [vmem:[#allocation2] sm:$0xff] 0.0
          %219 = vst [vmem:[#allocation2 + $0x8] sm:$0xff] 0.0
        $region44: #{tpu_custom_call.1} parent=31 // pred_fallthru
          _
        %v220 = vld [vmem:[%s187] sm:$0xff]
        %v221 = vld [vmem:[%s187 + $0x8] sm:$0xff]
        %v222 = vld [vmem:[%s187 + $0x10] sm:$0xff]
        %v223 = vld [vmem:[%s187 + $0x18] sm:$0xff]
        %v224 = vld [vmem:[%s187 + $0x20] sm:$0xff]
        %v225 = vld [vmem:[%s187 + $0x28] sm:$0xff]
        %v226 = vld [vmem:[%s187 + $0x30] sm:$0xff]
        %v227 = vld [vmem:[%s187 + $0x38] sm:$0xff]
        %v228 = vld [vmem:[%s187 + $0x40] sm:$0xff]
        %v229 = vld [vmem:[%s187 + $0x48] sm:$0xff]
        %v230 = vld [vmem:[%s187 + $0x50] sm:$0xff]
        %v231 = vld [vmem:[%s187 + $0x58] sm:$0xff]
        %v232 = vld [vmem:[%s187 + $0x60] sm:$0xff]
        %v233 = vld [vmem:[%s187 + $0x68] sm:$0xff]
        %v234 = vld [vmem:[%s187 + $0x70] sm:$0xff]
        %v235 = vld [vmem:[%s187 + $0x78] sm:$0xff]
        %s236 = smul.u32 %s24, 128
        %s237 = smul.u32 %s25, 128
        %s238 = sshra.s32 %s236, 7
        %s239 = sand.u32 %s236, 127
        %s240 = smul.addr %s238, 8
        %s241 = scalar_lea.vmem [#allocation7], %s240
        %v242 = vld [vmem:[%s241] sm:$0xff]
        %s243 = sshra.s32 %s237, 7
        %s244 = sand.u32 %s237, 127
        %s245 = smul.addr %s243, 8
        %s246 = scalar_lea.vmem [#allocation7], %s245
        %v247 = vld [vmem:[%s246] sm:$0xff]
        %s248 = smul.addr %s243, 8
        %s249 = scalar_lea.vmem [#allocation2], %s248
        %v250 = vld [vmem:[%s249] sm:$0xff]
        %251 = vmatpush.msra.mxu0 %v235
        %252 = vmatpush.msra.mxu0 %v234
        %253 = vmatpush.msra.mxu0 %v233
        %254 = vmatpush.msra.mxu0 %v232
        %255 = vmatpush.msra.mxu0 %v231
        %256 = vmatpush.msra.mxu0 %v230
        %257 = vmatpush.msra.mxu0 %v229
        %258 = vmatpush.msra.mxu0 %v228
        %259 = vmatpush.msra.mxu0 %v227
        %260 = vmatpush.msra.mxu0 %v226
        %261 = vmatpush.msra.mxu0 %v225
        %262 = vmatpush.msra.mxu0 %v224
        %263 = vmatpush.msra.mxu0 %v223
        %264 = vmatpush.msra.mxu0 %v222
        %265 = vmatpush.msra.mxu0 %v221
        %266 = vmatpush.msra.mxu0 %v220
        %267 = vmatmul.f32.gmra.mxu0 %v242
        %v268 = vpop.f32.mrf.mxu0
        %v269 = vadd.f32 0.0, %v268
        %270 = vdwg.mxu0
        %v271 = vadd.f32 %v250, %v269
        %272 = vst [vmem:[%s249] sm:$0xff] %v271
        %s273 = smul.addr %s238, 8
        %s274 = scalar_lea.vmem [#allocation2], %s273
        %v275 = vld [vmem:[%s274] sm:$0xff]
        %276 = vmatpush.xpose.msra.mxu0 %v235
        %277 = vmatpush.xpose.msra.mxu0 %v234
        %278 = vmatpush.xpose.msra.mxu0 %v233
        %279 = vmatpush.xpose.msra.mxu0 %v232
        %280 = vmatpush.xpose.msra.mxu0 %v231
        %281 = vmatpush.xpose.msra.mxu0 %v230
        %282 = vmatpush.xpose.msra.mxu0 %v229
        %283 = vmatpush.xpose.msra.mxu0 %v228
        %284 = vmatpush.xpose.msra.mxu0 %v227
        %285 = vmatpush.xpose.msra.mxu0 %v226
        %286 = vmatpush.xpose.msra.mxu0 %v225
        %287 = vmatpush.xpose.msra.mxu0 %v224
        %288 = vmatpush.xpose.msra.mxu0 %v223
        %289 = vmatpush.xpose.msra.mxu0 %v222
        %290 = vmatpush.xpose.msra.mxu0 %v221
        %291 = vmatpush.xpose.msra.mxu0 %v220
        %292 = vmatmul.f32.gmra.mxu0 %v247
        %v293 = vpop.f32.mrf.mxu0
        %v294 = vadd.f32 0.0, %v293
        %295 = vdwg.mxu0
        %v296 = vadd.f32 %v275, %v294
        %297 = vst [vmem:[%s274] sm:$0xff] %v296
        %p298 = scmp.eq.s32.totalorder %s24, 1
        %p299 = scmp.eq.s32.totalorder %s25, 1
        %p300 = pnand %p298, %p299
        %p301 = pneg %p300
        // Predicated region
        $region45: #{tpu_custom_call.1} parent=31 // pred_check
          _
        $region46: #{tpu_custom_call.1} parent=31 // pred_check_branch
          %303 = sbr.rel (%p300) target = $region48
        $region47: #{tpu_custom_call.1} parent=31 // pred_region
          %s304 = sld [smem:[#allocation3]]
          %v305 = vld [vmem:[#allocation7] sm:$0xff]
          %v306 = vld [vmem:[#allocation7 + $0x8] sm:$0xff]
          %v307 = vld [vmem:[#allocation2] sm:$0xff]
          %v308 = vld [vmem:[#allocation2 + $0x8] sm:$0xff]
          %v309 = vstv %s304
          %v310 = vmul.f32 %v309, %v307
          %v311 = vmul.f32 %v309, %v308
          %v312 = vsub.f32 %v305, %v310
          %v313 = vsub.f32 %v306, %v311
          %v314 = vmul.f32 %v312, %v312
          %v315 = vmul.f32 %v313, %v313
          %v316 = vadd.f32 %v314, %v315
          %317 = vadd.xlane.f32.xlu0 %v316
          %v318 = vpop.xlane.xlu0 %317
          %v319 = vmax.f32 %v318, 1e-24
          %v320 = vrsqrt.pop %v319
          %v321 = vmul.f32 %v320, %v319
          %v322 = vmul.f32 %v321, %v320
          %v323 = vmul.f32 0.5, %v322
          %v324 = vsub.f32 1.5, %v323
          %v325 = vmul.f32 %v320, %v324
          %vm326 = vweird.f32 %v319
          %vm327 = vweird.f32 %v320
          %vm328 = vmor %vm326, %vm327
          %v329 = vsel %vm328, %v320, %v325
          %v330 = vmul.f32 %v312, %v329
          %v331 = vmul.f32 %v313, %v329
          %332 = vst [vmem:[#allocation9] sm:$0xff] %v330
          %333 = vst [vmem:[#allocation9 + $0x8] sm:$0xff] %v331
        $region48: #{tpu_custom_call.1} parent=31 // pred_fallthru
          _
        // Predicated region
        $region49: #{tpu_custom_call.1} parent=31 // pred_check
          %p334 = pneg %p115
        $region50: #{tpu_custom_call.1} parent=31 // pred_check_branch
          %336 = sbr.rel (%p334) target = $region52
        $region51: #{tpu_custom_call.1} parent=31 // pred_region
          %338 = vsyncadd [#allocation6], 0
          %s340 = sshll.u32 [#allocation9], 4
          %s341 = int_to_ptr.vmem [resolvable:$true] %s340
          %s342 = sshll.u32 %s3, 4
          %s343 = int_to_ptr.hbm [resolvable:$true] %s342
          %345 = dma.vmem_to_hbm [thread:$0]  %s341, 256, %s343, [#allocation6]
        $region52: #{tpu_custom_call.1} parent=31 // pred_fallthru
          _
        // Predicated region
        $region53: #{tpu_custom_call.1} parent=31 // pred_check
          %p346 = pneg %p115
        $region54: #{tpu_custom_call.1} parent=31 // pred_check_branch
          %348 = sbr.rel (%p346) target = $region56
        $region55: #{tpu_custom_call.1} parent=31 // pred_region
          %350 = dma.done [#allocation6], 256
        $region56: #{tpu_custom_call.1} parent=31 // pred_fallthru
          _
      $region32: #{tpu_custom_call.1} parent=5 // pred_fallthru
        _
      %p351 = scmp.le.s32.totalorder 2, %s15
      // Predicated region
      $region57: #{tpu_custom_call.1} parent=5 // pred_check
        %p352 = pneg %p351
      $region58: #{tpu_custom_call.1} parent=5 // pred_check_branch
        %354 = sbr.rel (%p352) target = $region60
      $region59: #{tpu_custom_call.1} parent=5 // pred_region
        %s355 = ssub.s32 %s15, 2
      $region60: #{tpu_custom_call.1} parent=5 // pred_fallthru
        _
    $region6: #{tpu_custom_call.1} parent=1 // loop_footer
      %s19 = sadd.s32 1, %s15
    $region7: #{tpu_custom_call.1} parent=1 // loop_footer_branch
      %14 = sbr.rel target = $region3
    $region8: #{tpu_custom_call.1} parent=1 // loop_exit
      _
    %356 = vsyncpa [#allocation5], 1
    %s357 = scalar_lea.sflag [#allocation5], 1
    %358 = vsyncpa %s357, 1
    %359 = vsyncpa [#allocation8], 1
    %360 = vsyncpa [#allocation6], 1
    %s361 = scalar_lea.sflag [#allocation6], 1
    %362 = vsyncpa %s361, 1

</llo_original>
